<compile_context>
chip_gen: v7x
topology: tpu7x:2x2x1
jax: 0.10.0
libtpu: 0.0.40
codegen_flags: <defaults>
</compile_context>

<pallas_src>
import functools

import jax
import jax.numpy as jnp
from jax.experimental import pallas as pl
from jax.experimental.pallas import tpu as pltpu

DIM = 4            # data dimension
N_FLOW_LAYERS = 2  # n_layers
HIDDEN_DIMS = [32]
TILE_COLS = 2048   # max lane tile over the fused B*S axis


def _rup(a, b):
    return ((a + b - 1) // b) * b


def _cdiv(a, b):
    return (a + b - 1) // b


# ----------------------------------------------------------------------------
# masks
# ----------------------------------------------------------------------------
def mask_values(layer_idx, dim):
    """'none' if dim == 1 else f'ordered_{layer_idx % 2}'."""
    if dim == 1:
        return (0.0,)
    half = dim // 2
    m = [1.0 if j < half else 0.0 for j in range(dim)]
    if layer_idx % 2 == 1:
        m = [1.0 - v for v in m]
    return tuple(m)


# ----------------------------------------------------------------------------
# host-side weight packing:
#   wmat (bf16): fused first layer, block-diag middle layers, merged head
#   wvec (f32) : head bias, TimeTanh weights, mask, middle-layer biases
# plus a static `layout` (python ints) for in-kernel unpacking.
# ----------------------------------------------------------------------------
def pack_params(params, dim, dpad):
    kin = 2 * dpad + 8            # activation slab rows: [x | h | t, 1, pad]
    d2 = 2 * dpad

    mat_parts, vec_parts, layout = [], [], []
    m_off = v_off = 0
    max_cols = 1

    for li, lp in enumerate(params):
        latent, latent2 = lp["latent_net"], lp["latent_net2"]
        time_w = lp["time_w"]
        m = jnp.asarray(mask_values(li, dim), jnp.float32)

        # ---- fused first layer: hid = tanh(A @ [x; h; t; 1]) ---------------
        (w1, b1), (w2, b2) = latent[0], latent2[0]
        h0 = w1.shape[1]
        A = jnp.zeros((2 * h0, kin), jnp.float32)
        # mask folded into the z-columns, so the kernel consumes x directly
        A = A.at[:, :dim].set(
            (jnp.concatenate([w1[:dim], w2[:dim]], axis=1) * m[:, None]).T)
        A = A.at[:, dpad:dpad + dim].set(
            jnp.concatenate([jnp.zeros((dim, h0), jnp.float32),
                             w2[dim:2 * dim]], axis=1).T)
        A = A.at[:, 2 * dpad].set(
            jnp.concatenate([w1[dim], jnp.zeros((h0,), jnp.float32)]))
        A = A.at[:, 2 * dpad + 1].set(jnp.concatenate([b1[0], b2[0]]))
        a_entry = (m_off, 2 * h0, kin)
        mat_parts.append((m_off, A))
        m_off += _rup(2 * h0, 8)
        max_cols = max(max_cols, kin)

        # ---- block-diagonal middle layers (both MLPs share hidden_dims) ----
        mids, mid_bs = [], []
        for (wm1, bm1), (wm2, bm2) in zip(latent[1:-1], latent2[1:-1]):
            ci, co = wm1.shape
            Wm = jnp.zeros((2 * co, 2 * ci), jnp.float32)
            Wm = Wm.at[:co, :ci].set(wm1.T)
            Wm = Wm.at[co:, ci:].set(wm2.T)
            mids.append((m_off, 2 * co, 2 * ci))
            mat_parts.append((m_off, Wm))
            m_off += _rup(2 * co, 8)
            max_cols = max(max_cols, 2 * ci)
            mid_bs.append(v_off)
            vec_parts.append((v_off, jnp.concatenate([bm1[0], bm2[0]])[:, None]))
            v_off += _rup(2 * co, 8)

        # ---- merged scale/shift head: rows [:dpad]=scale, [dpad:]=shift ----
        (wo1, bo1), (wo2, bo2) = latent[-1], latent2[-1]
        hl = wo1.shape[0]
        Wh = jnp.zeros((d2, 2 * hl), jnp.float32)
        Wh = Wh.at[:dim, :hl].set(wo1[:, :dim].T)              # scale (net1 only)
        Wh = Wh.at[dpad:dpad + dim, :hl].set(wo1[:, dim:].T)   # shift (net1)
        Wh = Wh.at[dpad:dpad + dim, hl:].set(wo2.T)            # + graph net output
        h_entry = (m_off, d2, 2 * hl)
        mat_parts.append((m_off, Wh))
        m_off += _rup(d2, 8)
        max_cols = max(max_cols, 2 * hl)

        # ---- f32 vectors: col0 = head bias, col1 = TimeTanh w, col2 = mask -
        vb = jnp.zeros((d2, 8), jnp.float32)
        vb = vb.at[:dim, 0].set(bo1[0, :dim])
        vb = vb.at[dpad:dpad + dim, 0].set(bo1[0, dim:] + bo2[0])
        vb = vb.at[:dim, 1].set(time_w[0, :dim])
        vb = vb.at[dpad:dpad + dim, 1].set(time_w[0, dim:])
        vb = vb.at[:dim, 2].set(m)
        v_entry = v_off
        vec_parts.append((v_off, vb))
        v_off += _rup(d2, 8)

        layout.append((a_entry, tuple(mids), h_entry, v_entry, tuple(mid_bs)))

    wpad = _rup(max(max_cols, 128), 128)
    wmat = jnp.zeros((max(m_off, 8), wpad), jnp.float32)
    for off, arr in mat_parts:
        wmat = wmat.at[off:off + arr.shape[0], :arr.shape[1]].set(arr)
    wvec = jnp.zeros((max(v_off, 8), 8), jnp.float32)
    for off, arr in vec_parts:
        wvec = wvec.at[off:off + arr.shape[0], :arr.shape[1]].set(arr)
    return wmat.astype(jnp.bfloat16), wvec, tuple(layout)


# ----------------------------------------------------------------------------
# Pallas kernel: full flow (all coupling layers) for one column tile of rows
# ----------------------------------------------------------------------------
def _flow_kernel(act_ref, wmat_ref, wvec_ref, out_ref, *, layout, dpad):
    f32 = jnp.float32
    bf16 = jnp.bfloat16

    act = act_ref[...]                      # (Kin, R) f32: [x | h | t, 1, pad]
    x = act[:dpad, :]                       # (dpad, R) current flow state
    ctx = act[dpad:, :]                     # (dpad+8, R): [h; t; 1; pad], constant
    t_row = ctx[dpad:dpad + 1, :]           # (1, R) time

    for (a_off, a_rows, a_cols), mids, (h_off, h_rows, h_cols), v_off, mid_bs in layout:
        # fused first layer of latent_net & latent_net2: one K-stacked bf16
        # matmul (mask + bias folded into A, x/h/t enter via their own columns)
        full = jnp.concatenate([x, ctx], axis=0).astype(bf16)
        A = wmat_ref[a_off:a_off + a_rows, :a_cols]
        hid = jnp.tanh(jnp.dot(A, full, preferred_element_type=f32))

        for (mo, mr, mc), vb_off in zip(mids, mid_bs):       # block-diag middles
            Wm = wmat_ref[mo:mo + mr, :mc]
            bm = wvec_ref[vb_off:vb_off + mr, 0:1]
            hid = jnp.tanh(jnp.dot(Wm, hid.astype(bf16),
                                   preferred_element_type=f32) + bm)

        # merged scale/shift head: rows [:dpad] = scale, rows [dpad:] = shift
        Wh = wmat_ref[h_off:h_off + h_rows, :h_cols]
        vb = wvec_ref[v_off:v_off + h_rows, :]
        head = jnp.dot(Wh, hid.astype(bf16),
                       preferred_element_type=f32) + vb[:, 0:1]

        # fused TimeTanh: one tanh covers both the scale and shift halves
        t_all = jnp.tanh(vb[:, 1:2] * t_row)                 # (2*dpad, R)
        st = head * t_all                                    # scale*ts | shift*tb
        mcol = vb[:dpad, 2:3]                                # binary mask column
        x = x * mcol + (1.0 - mcol) * (x * jnp.exp(st[:dpad, :]) + st[dpad:, :])

    out_ref[...] = x.astype(out_ref.dtype)


# ----------------------------------------------------------------------------
# CouplingFlow.forward wrapper
# ----------------------------------------------------------------------------
def coupling_flow_forward(params, x, h, t):
    """CouplingFlow.forward (t0=None path). x: (B,1|S,dim), h: (B,1|S,dim)|None,
    t: (B,S,1)."""
    # TODO(synk): t0 inverse-flow path of CouplingFlow.forward not implemented.
    B, S, _ = t.shape
    dim = x.shape[-1]
    out_dtype = x.dtype
    if h is None:
        # TODO(synk): h=None graph-embedding path treated as zeros.
        h = jnp.zeros((B, 1, dim), x.dtype)
    if x.shape[-2] == 1:
        x = jnp.broadcast_to(x, (B, S, dim))   # repeat_interleave along -2
    if h.shape[-2] == 1:
        h = jnp.broadcast_to(h, (B, S, dim))

    N = B * S
    dpad = _rup(dim, 8)
    kin = 2 * dpad + 8

    # Lane tile over fused B*S: as large as possible (amortize ~0.35us/step),
    # >=2 grid steps when feasible (v7x megacore), balanced to limit padding.
    n128 = _rup(N, 128)
    tile = min(TILE_COLS, n128)
    if n128 >= 256:
        tile = min(tile, _rup(_cdiv(n128, 2), 128))
    steps = _cdiv(n128, tile)
    tile = _rup(_cdiv(n128, steps), 128)
    n_pad = steps * tile

    # Single feature-major activation slab [x | h | t | 1]: one relayout pass,
    # one DMA stream into the kernel.
    f32 = jnp.float32
    xt = x.reshape(N, dim).T.astype(f32)
    ht = h.reshape(N, dim).T.astype(f32)
    tt = t.reshape(N, 1).T.astype(f32)
    zrow = jnp.zeros((dpad - dim, N), f32)
    act = jnp.concatenate(
        [xt, zrow, ht, zrow, tt, jnp.ones((1, N), f32),
         jnp.zeros((kin - 2 * dpad - 2, N), f32)], axis=0)
    act = jnp.pad(act, ((0, 0), (0, n_pad - N)))

    wmat, wvec, layout = pack_params(params, dim, dpad)
    kernel = functools.partial(_flow_kernel, layout=layout, dpad=dpad)

    yt = pl.pallas_call(
        kernel,
        out_shape=jax.ShapeDtypeStruct((dpad, n_pad), f32),
        grid_spec=pltpu.PrefetchScalarGridSpec(
            num_scalar_prefetch=0,
            grid=(steps,),
            in_specs=[
                pl.BlockSpec((kin, tile), lambda i: (0, i)),
                pl.BlockSpec(wmat.shape, lambda i: (0, 0)),   # grid-invariant
                pl.BlockSpec(wvec.shape, lambda i: (0, 0)),   # grid-invariant
            ],
            out_specs=pl.BlockSpec((dpad, tile), lambda i: (0, i)),
        ),
        compiler_params=pltpu.CompilerParams(
            dimension_semantics=("parallel",)),   # rows independent
    )(act, wmat, wvec)

    return yt[:dim, :N].T.reshape(B, S, dim).astype(out_dtype)


# ----------------------------------------------------------------------------
# deterministic parameter init + pure-JAX references
# ----------------------------------------------------------------------------
def init_mlp(key, in_dim, hidden_dims, out_dim):
    dims = [in_dim] + list(hidden_dims) + [out_dim]
    layers = []
    for i in range(len(dims) - 1):
        key, k1, k2 = jax.random.split(key, 3)
        W = jax.random.normal(k1, (dims[i], dims[i + 1]), jnp.float32) / jnp.sqrt(dims[i])
        b = 0.01 * jax.random.normal(k2, (1, dims[i + 1]), jnp.float32)
        layers.append((W, b))
    return key, layers


def init_params(key, dim, n_layers, hidden_dims):
    params = []
    for _ in range(n_layers):
        key, latent = init_mlp(key, dim + 1, hidden_dims, 2 * dim)
        key, latent2 = init_mlp(key, 2 * dim, hidden_dims, dim)
        key, kt = jax.random.split(key)
        time_w = jax.random.normal(kt, (1, 2 * dim), jnp.float32)
        params.append({"latent_net": latent, "latent_net2": latent2, "time_w": time_w})
    return key, params


def reference_forward(params, x, h, t, emulate_bf16=False):
    B, S, _ = t.shape
    dim = x.shape[-1]
    if x.shape[-2] == 1:
        x = jnp.broadcast_to(x, (B, S, dim))
    if h.shape[-2] == 1:
        h = jnp.broadcast_to(h, (B, S, dim))

    def cast(a):
        return a.astype(jnp.bfloat16).astype(jnp.float32) if emulate_bf16 else a

    def mlp(a, layers):
        for j, (W, b) in enumerate(layers):
            a = jnp.dot(cast(a), cast(W), precision="highest") + b
            if j < len(layers) - 1:
                a = jnp.tanh(a)
        return a

    for i, lp in enumerate(params):
        m = jnp.asarray(mask_values(i, dim), jnp.float32).reshape(1, 1, dim)
        z = x * m
        p = mlp(jnp.concatenate([z, t], -1), lp["latent_net"])
        scale, shift = p[..., :dim], p[..., dim:]
        shift = shift + mlp(jnp.concatenate([z, h], -1), lp["latent_net2"])
        tt = jnp.tanh(t * lp["time_w"])
        t_scale, t_shift = tt[..., :dim], tt[..., dim:]
        x = z + (1.0 - m) * (x * jnp.exp(scale * t_scale) + shift * t_shift)
    return x


# ----------------------------------------------------------------------------
if __name__ == "__main__":
    key = jax.random.PRNGKey(0)

    def run_case(key, dim, n_layers, hidden_dims, B, S, x_seq, h_seq):
        key, params = init_params(key, dim, n_layers, hidden_dims)
        key, kx, kh, kt = jax.random.split(key, 4)
        x = jax.random.normal(kx, (B, x_seq, dim), jnp.float32)
        h = jax.random.normal(kh, (B, h_seq, dim), jnp.float32)
        t = jnp.sort(jax.random.uniform(kt, (B, S, 1), jnp.float32), axis=-2)

        y = jax.block_until_ready(coupling_flow_forward(params, x, h, t))
        assert y.shape == (B, S, dim)

        # Tight structural check against a reference that emulates the kernel's
        # bf16 matmul operands (everything else in f32).
        y_bf = reference_forward(params, x, h, t, emulate_bf16=True)
        err_bf = float(jnp.max(jnp.abs(y - y_bf)))
        assert err_bf < 5e-3, f"mismatch vs bf16-matmul reference: {err_bf}"

        # Loose sanity check against the exact f32 reference (budgets for the
        # bf16 MXU operand rounding).
        y_f32 = reference_forward(params, x, h, t, emulate_bf16=False)
        rel = float(jnp.max(jnp.abs(y - y_f32) / (1.0 + jnp.abs(y_f32))))
        assert rel < 5e-2, f"mismatch vs f32 reference: {rel}"
        return key

    # primary config (module defaults used here): x/h given with seq dim 1
    key = run_case(key, DIM, N_FLOW_LAYERS, HIDDEN_DIMS, B=2, S=8, x_seq=1, h_seq=1)
    # odd dim, two hidden layers (exercises the block-diag middle layer),
    # multi-step grid with column padding, x already expanded along seq
    key = run_case(key, dim=5, n_layers=3, hidden_dims=[24, 16], B=3, S=100,
                   x_seq=100, h_seq=1)

    print("KERNEL_OK")
</pallas_src>

<mosaic_0001>
module attributes {stable_mosaic.version = 11 : i64} {
  func.func @_flow_kernel(%arg0: i32, %arg1: memref<24x128xf32, #tpu.memory_space<vmem>>, %arg2: memref<160x128xbf16, #tpu.memory_space<vmem>>, %arg3: memref<32x8xf32, #tpu.memory_space<vmem>>, %arg4: memref<8x128xf32, #tpu.memory_space<vmem>>) attributes {dimension_semantics = [#tpu.dimension_semantics<parallel>], iteration_bounds = array<i64: 1>, scalar_prefetch = 0 : i64, scratch_operands = 0 : i64, tpu.core_type = #tpu.core_type<tc>, window_params = [{transform_indices = @transform_0, window_bounds = array<i64: 24, 128>}, {pipeline_mode = #tpu.pipeline_mode<synchronous>, transform_indices = @transform_1, window_bounds = array<i64: 160, 128>}, {pipeline_mode = #tpu.pipeline_mode<synchronous>, transform_indices = @transform_2, window_bounds = array<i64: 32, 8>}, {transform_indices = @transform_3, window_bounds = array<i64: 8, 128>}]} {
    %c0 = arith.constant 0 : index
    %c0_0 = arith.constant 0 : index
    %0 = vector.load %arg1[%c0, %c0_0] : memref<24x128xf32, #tpu.memory_space<vmem>>, vector<24x128xf32>
    %1 = vector.extract_strided_slice %0 {offsets = [0, 0], sizes = [8, 128], strides = [1, 1]} : vector<24x128xf32> to vector<8x128xf32>
    %2 = vector.extract_strided_slice %0 {offsets = [8, 0], sizes = [16, 128], strides = [1, 1]} : vector<24x128xf32> to vector<16x128xf32>
    %3 = vector.extract_strided_slice %2 {offsets = [8, 0], sizes = [1, 128], strides = [1, 1]} : vector<16x128xf32> to vector<1x128xf32>
    %4 = tpu.concatenate %1, %2 in 0 : vector<8x128xf32>, vector<16x128xf32> -> vector<24x128xf32>
    %5 = arith.truncf %4 : vector<24x128xf32> to vector<24x128xbf16>
    %c0_1 = arith.constant 0 : index
    %c0_2 = arith.constant 0 : index
    %6 = vector.load %arg2[%c0_1, %c0_2] : memref<160x128xbf16, #tpu.memory_space<vmem>>, vector<64x24xbf16>
    %cst = arith.constant dense<0.000000e+00> : vector<64x128xf32>
    %7 = tpu.matmul %6, %5, %cst {dimension_numbers = #tpu.dot_dimension_numbers<[1], [0], [0], [1], [0, 0, 1, 1], [], []>} : vector<64x24xbf16>, vector<24x128xbf16>, vector<64x128xf32> -> vector<64x128xf32>
    %8 = math.tanh %7 : vector<64x128xf32>
    %c64 = arith.constant 64 : index
    %c0_3 = arith.constant 0 : index
    %9 = vector.load %arg2[%c64, %c0_3] : memref<160x128xbf16, #tpu.memory_space<vmem>>, vector<16x64xbf16>
    %c0_4 = arith.constant 0 : index
    %c0_5 = arith.constant 0 : index
    %10 = vector.load %arg3[%c0_4, %c0_5] : memref<32x8xf32, #tpu.memory_space<vmem>>, vector<16x8xf32>
    %11 = arith.truncf %8 : vector<64x128xf32> to vector<64x128xbf16>
    %cst_6 = arith.constant dense<0.000000e+00> : vector<16x128xf32>
    %12 = tpu.matmul %9, %11, %cst_6 {dimension_numbers = #tpu.dot_dimension_numbers<[1], [0], [0], [1], [0, 0, 1, 1], [], []>} : vector<16x64xbf16>, vector<64x128xbf16>, vector<16x128xf32> -> vector<16x128xf32>
    %13 = vector.extract_strided_slice %10 {offsets = [0, 0], sizes = [16, 1], strides = [1, 1]} : vector<16x8xf32> to vector<16x1xf32>
    %14 = vector.broadcast %13 : vector<16x1xf32> to vector<16x128xf32>
    %15 = arith.addf %12, %14 : vector<16x128xf32>
    %16 = vector.extract_strided_slice %10 {offsets = [0, 1], sizes = [16, 1], strides = [1, 1]} : vector<16x8xf32> to vector<16x1xf32>
    %17 = vector.broadcast %16 : vector<16x1xf32> to vector<16x128xf32>
    %18 = vector.broadcast %3 : vector<1x128xf32> to vector<16x128xf32>
    %19 = arith.mulf %17, %18 : vector<16x128xf32>
    %20 = math.tanh %19 : vector<16x128xf32>
    %21 = arith.mulf %15, %20 : vector<16x128xf32>
    %22 = vector.extract_strided_slice %10 {offsets = [0, 2], sizes = [8, 1], strides = [1, 1]} : vector<16x8xf32> to vector<8x1xf32>
    %23 = vector.broadcast %22 : vector<8x1xf32> to vector<8x128xf32>
    %24 = arith.mulf %1, %23 : vector<8x128xf32>
    %cst_7 = arith.constant 1.000000e+00 : f32
    %25 = vector.broadcast %cst_7 : f32 to vector<8x1xf32>
    %26 = arith.subf %25, %22 : vector<8x1xf32>
    %27 = vector.extract_strided_slice %21 {offsets = [0, 0], sizes = [8, 128], strides = [1, 1]} : vector<16x128xf32> to vector<8x128xf32>
    %28 = math.exp %27 : vector<8x128xf32>
    %29 = arith.mulf %1, %28 : vector<8x128xf32>
    %30 = vector.extract_strided_slice %21 {offsets = [8, 0], sizes = [8, 128], strides = [1, 1]} : vector<16x128xf32> to vector<8x128xf32>
    %31 = arith.addf %29, %30 : vector<8x128xf32>
    %32 = vector.broadcast %26 : vector<8x1xf32> to vector<8x128xf32>
    %33 = arith.mulf %32, %31 : vector<8x128xf32>
    %34 = arith.addf %24, %33 : vector<8x128xf32>
    %35 = tpu.concatenate %34, %2 in 0 : vector<8x128xf32>, vector<16x128xf32> -> vector<24x128xf32>
    %36 = arith.truncf %35 : vector<24x128xf32> to vector<24x128xbf16>
    %c80 = arith.constant 80 : index
    %c0_8 = arith.constant 0 : index
    %37 = vector.load %arg2[%c80, %c0_8] : memref<160x128xbf16, #tpu.memory_space<vmem>>, vector<64x24xbf16>
    %cst_9 = arith.constant dense<0.000000e+00> : vector<64x128xf32>
    %38 = tpu.matmul %37, %36, %cst_9 {dimension_numbers = #tpu.dot_dimension_numbers<[1], [0], [0], [1], [0, 0, 1, 1], [], []>} : vector<64x24xbf16>, vector<24x128xbf16>, vector<64x128xf32> -> vector<64x128xf32>
    %39 = math.tanh %38 : vector<64x128xf32>
    %c144 = arith.constant 144 : index
    %c0_10 = arith.constant 0 : index
    %40 = vector.load %arg2[%c144, %c0_10] : memref<160x128xbf16, #tpu.memory_space<vmem>>, vector<16x64xbf16>
    %c16 = arith.constant 16 : index
    %c0_11 = arith.constant 0 : index
    %41 = vector.load %arg3[%c16, %c0_11] : memref<32x8xf32, #tpu.memory_space<vmem>>, vector<16x8xf32>
    %42 = arith.truncf %39 : vector<64x128xf32> to vector<64x128xbf16>
    %cst_12 = arith.constant dense<0.000000e+00> : vector<16x128xf32>
    %43 = tpu.matmul %40, %42, %cst_12 {dimension_numbers = #tpu.dot_dimension_numbers<[1], [0], [0], [1], [0, 0, 1, 1], [], []>} : vector<16x64xbf16>, vector<64x128xbf16>, vector<16x128xf32> -> vector<16x128xf32>
    %44 = vector.extract_strided_slice %41 {offsets = [0, 0], sizes = [16, 1], strides = [1, 1]} : vector<16x8xf32> to vector<16x1xf32>
    %45 = vector.broadcast %44 : vector<16x1xf32> to vector<16x128xf32>
    %46 = arith.addf %43, %45 : vector<16x128xf32>
    %47 = vector.extract_strided_slice %41 {offsets = [0, 1], sizes = [16, 1], strides = [1, 1]} : vector<16x8xf32> to vector<16x1xf32>
    %48 = vector.broadcast %47 : vector<16x1xf32> to vector<16x128xf32>
    %49 = vector.broadcast %3 : vector<1x128xf32> to vector<16x128xf32>
    %50 = arith.mulf %48, %49 : vector<16x128xf32>
    %51 = math.tanh %50 : vector<16x128xf32>
    %52 = arith.mulf %46, %51 : vector<16x128xf32>
    %53 = vector.extract_strided_slice %41 {offsets = [0, 2], sizes = [8, 1], strides = [1, 1]} : vector<16x8xf32> to vector<8x1xf32>
    %54 = vector.broadcast %53 : vector<8x1xf32> to vector<8x128xf32>
    %55 = arith.mulf %34, %54 : vector<8x128xf32>
    %cst_13 = arith.constant 1.000000e+00 : f32
    %56 = vector.broadcast %cst_13 : f32 to vector<8x1xf32>
    %57 = arith.subf %56, %53 : vector<8x1xf32>
    %58 = vector.extract_strided_slice %52 {offsets = [0, 0], sizes = [8, 128], strides = [1, 1]} : vector<16x128xf32> to vector<8x128xf32>
    %59 = math.exp %58 : vector<8x128xf32>
    %60 = arith.mulf %34, %59 : vector<8x128xf32>
    %61 = vector.extract_strided_slice %52 {offsets = [8, 0], sizes = [8, 128], strides = [1, 1]} : vector<16x128xf32> to vector<8x128xf32>
    %62 = arith.addf %60, %61 : vector<8x128xf32>
    %63 = vector.broadcast %57 : vector<8x1xf32> to vector<8x128xf32>
    %64 = arith.mulf %63, %62 : vector<8x128xf32>
    %65 = arith.addf %55, %64 : vector<8x128xf32>
    %c0_14 = arith.constant 0 : index
    %c0_15 = arith.constant 0 : index
    %66 = vector.load %arg4[%c0_14, %c0_15] : memref<8x128xf32, #tpu.memory_space<vmem>>, vector<8x128xf32>
    tpu.vector_store %arg4[%c0_14, %c0_15], %65 {strides = array<i32>} : memref<8x128xf32, #tpu.memory_space<vmem>>, vector<8x128xf32>,
    return
  }
  func.func @transform_0(%arg0: i32) -> (i32, i32) {
    %c0_i32 = arith.constant 0 : i32
    %c0_i32_0 = arith.constant 0 : i32
    return %c0_i32, %arg0 : i32, i32
  }
  func.func @transform_1(%arg0: i32) -> (i32, i32) {
    %c0_i32 = arith.constant 0 : i32
    %c0_i32_0 = arith.constant 0 : i32
    %c0_i32_1 = arith.constant 0 : i32
    return %c0_i32, %c0_i32_0 : i32, i32
  }
  func.func @transform_2(%arg0: i32) -> (i32, i32) {
    %c0_i32 = arith.constant 0 : i32
    %c0_i32_0 = arith.constant 0 : i32
    %c0_i32_1 = arith.constant 0 : i32
    return %c0_i32, %c0_i32_0 : i32, i32
  }
  func.func @transform_3(%arg0: i32) -> (i32, i32) {
    %c0_i32 = arith.constant 0 : i32
    %c0_i32_0 = arith.constant 0 : i32
    return %c0_i32, %arg0 : i32, i32
  }
}

</mosaic_0001>

<llo_original>
// kernel: tpu_custom_call.1
$region0: #{tpu_custom_call.1}
  #allocation0 [shape = 'u32[]', space=smem, size = 0x4, offset = 0x4, fixed_abs, tag = 'smem constant byte address 0x4 - core index']
  #allocation1 [shape = 'u32[144,128]{1,0:T(1,128)}', space=vmem, size = 0x12000, scoped, tag = 'internal scratch']
  %s0 = inlined_call_operand.vmem [shape: f32[24,128], index: 0, kind: input, shape index: {}]
  %s1 = inlined_call_operand.hbm [shape: bf16[160,128], index: 1, kind: input, shape index: {}]
  %s2 = inlined_call_operand.vmem [shape: f32[32,8], index: 2, kind: input, shape index: {}]
  %s3 = inlined_call_operand.hbm [shape: f32[8,128], index: 3, kind: output, shape index: {}]
  %s4 = sld [smem:[#allocation0]]
  $region26: #{tpu_custom_call.1} parent=0
    _
  %s6 = ssub.s32 1, %s4
  %s7 = scalar_select 0, %s6, %s4
  $region1: #{tpu_custom_call.1} parent=0
    #allocation2 [shape = 'u8[40960]{0}', space=vmem, size = 0xa000, scoped, tag = 'input window, operand 1, single buffered']
    #allocation3 [shape = 's32[1]{0}', space=sflag, size = 0x4, scoped, tag = 'scoped memory for tpu_custom_call.1']
    #allocation4 [shape = 's32[1]{0}', space=sflag, size = 0x4, scoped, tag = 'scoped memory for tpu_custom_call.1']
    #allocation5 [shape = 'u8[4096]{0}', space=vmem, size = 0x1000, scoped, tag = 'output window, operand 0, single buffered']
    %8 = vsyncpa [#allocation3], 0
    %9 = vsyncpa [#allocation4], 0
    // Predicated region
    $region2: #{tpu_custom_call.1} parent=1 // pred_check
      _
    $region3: #{tpu_custom_call.1} parent=1 // pred_check_branch
      %11 = sbr.rel (0) target = $region5
    $region4: #{tpu_custom_call.1} parent=1 // pred_region
      _
    $region5: #{tpu_custom_call.1} parent=1 // pred_fallthru
      _
    // Predicated region
    $region6: #{tpu_custom_call.1} parent=1 // pred_check
      _
    $region7: #{tpu_custom_call.1} parent=1 // pred_check_branch
      %13 = sbr.rel (0) target = $region9
    $region8: #{tpu_custom_call.1} parent=1 // pred_region
      %s15 = ssub.s32 1280, 1280
      %16 = vsyncadd [#allocation3], %s15
      %s17 = sshll.u32 [#allocation2], 4
      %s18 = int_to_ptr.vmem [resolvable:$true] %s17
      %23 = dma.hbm_to_vmem [thread:$0]  %s1, 1280, %s18, [#allocation3], 64, 64, 4
    $region9: #{tpu_custom_call.1} parent=1 // pred_fallthru
      _
    // Predicated region
    $region10: #{tpu_custom_call.1} parent=1 // pred_check
      _
    $region11: #{tpu_custom_call.1} parent=1 // pred_check_branch
      %25 = sbr.rel (0) target = $region13
    $region12: #{tpu_custom_call.1} parent=1 // pred_region
      _
    $region13: #{tpu_custom_call.1} parent=1 // pred_fallthru
      _
    // Predicated region
    $region14: #{tpu_custom_call.1} parent=1 // pred_check
      _
    $region15: #{tpu_custom_call.1} parent=1 // pred_check_branch
      %27 = sbr.rel (0) target = $region17
    $region16: #{tpu_custom_call.1} parent=1 // pred_region
      %28 = dma.done [#allocation3], 1280
    $region17: #{tpu_custom_call.1} parent=1 // pred_fallthru
      _
    %v30 = vld [vmem:[%s0] sm:$0xff]
    %v31 = vld [vmem:[%s0 + $0x8] sm:$0xff]
    %v32 = vld [vmem:[%s0 + $0x10] sm:$0xff]
    %v33 = vpack.c.bf16 %v31, %v30
    %v34 = vpack.c.bf16 %v32, %v32
    %v35 = vld [vmem:[#allocation2] sm:$0xf]
    %v36 = vld [vmem:[#allocation2 + $0x4] sm:$0xf]
    %v37 = vld [vmem:[#allocation2 + $0x8] sm:$0xf]
    %v38 = vld [vmem:[#allocation2 + $0xc] sm:$0xf]
    %v39 = vld [vmem:[#allocation2 + $0x10] sm:$0xf]
    %v40 = vld [vmem:[#allocation2 + $0x14] sm:$0xf]
    %v41 = vld [vmem:[#allocation2 + $0x18] sm:$0xf]
    %v42 = vld [vmem:[#allocation2 + $0x1c] sm:$0xf]
    %v51 = vunpack.c.l.b16 %v35
    %v52 = vunpack.c.l.b16 %v36
    %v53 = vunpack.c.l.b16 %v37
    %v54 = vunpack.c.l.b16 %v38
    %v55 = vunpack.c.l.b16 %v39
    %v56 = vunpack.c.l.b16 %v40
    %v57 = vunpack.c.l.b16 %v41
    %v58 = vunpack.c.l.b16 %v42
    %v59 = vpack.c.b16 %v52, %v51
    %v60 = vpack.c.b16 %v54, %v53
    %v61 = vpack.c.b16 %v56, %v55
    %v62 = vpack.c.b16 %v58, %v57
    %vm63 = vcmask 195584
    %v65 = vsel %vm63, %v59, 0
    %v68 = vsel %vm63, %v60, 0
    %v71 = vsel %vm63, %v61, 0
    %v74 = vsel %vm63, %v62, 0
    %vm76 = vcmask 1043456
    %v78 = vsel %vm76, %v34, 0
    %80 = vmatprep.subr.bf16.mxu0 0
    %81 = vmatpush1.bf16.msra.mxu0 %v33
    %82 = vmatprep.subr.bf16.mxu0 0
    %83 = vmatpush1.bf16.msra.mxu0 %v78
    %84 = vmatprep.subr.bf16.mxu0 0
    %85 = vmatpush1.bf16.msra.mxu0 0
    %86 = vmatprep.subr.bf16.mxu0 0
    %87 = vmatpush1.bf16.msra.mxu0 0
    %88 = vmatprep.subr.bf16.mxu0 0
    %89 = vmatpush1.bf16.msra.mxu0 0
    %90 = vmatprep.subr.bf16.mxu0 0
    %91 = vmatpush1.bf16.msra.mxu0 0
    %92 = vmatprep.subr.bf16.mxu0 0
    %93 = vmatpush1.bf16.msra.mxu0 0
    %94 = vmatprep.subr.bf16.mxu0 0
    %95 = vmatpush1.bf16.msra.mxu0 0
    %96 = vmatprep.subr.bf16.mxu0 0
    %97 = vmatpush1.bf16.msra.mxu0 0
    %98 = vmatprep.subr.bf16.mxu0 0
    %99 = vmatpush1.bf16.msra.mxu0 0
    %100 = vmatprep.subr.bf16.mxu0 0
    %101 = vmatpush1.bf16.msra.mxu0 0
    %102 = vmatprep.subr.bf16.mxu0 0
    %103 = vmatpush1.bf16.msra.mxu0 0
    %104 = vmatprep.subr.bf16.mxu0 0
    %105 = vmatpush1.bf16.msra.mxu0 0
    %106 = vmatprep.subr.bf16.mxu0 0
    %107 = vmatpush1.bf16.msra.mxu0 0
    %108 = vmatprep.subr.bf16.mxu0 0
    %109 = vmatpush1.bf16.msra.mxu0 0
    %110 = vmatprep.subr.bf16.mxu0 0
    %111 = vmatpush1.bf16.msra.mxu0 0
    %112 = vmatprep.mubr.bf16.mxu0 0
    %113 = vmatmul.mubr.bf16.gmra.mrb[0].mxu0 %v65
    %v114 = vpop.f32.mrb[0].mxu0
    %v115 = vadd.f32 0.0, %v114
    %v116 = vpop.f32.mrb[0].mxu0
    %v117 = vpop.f32.mrb[0].mxu0
    %v118 = vadd.f32 0.0, %v117
    %v119 = vpop.f32.mrb[0].mxu0
    %120 = vmatprep.mubr.bf16.mxu0 0
    %121 = vmatmul.mubr.bf16.gmra.mrb[0].mxu0 %v68
    %v122 = vpop.f32.mrb[0].mxu0
    %v123 = vadd.f32 0.0, %v122
    %v124 = vpop.f32.mrb[0].mxu0
    %v125 = vpop.f32.mrb[0].mxu0
    %v126 = vadd.f32 0.0, %v125
    %v127 = vpop.f32.mrb[0].mxu0
    %128 = vmatprep.mubr.bf16.mxu0 0
    %129 = vmatmul.mubr.bf16.gmra.mrb[0].mxu0 %v71
    %v130 = vpop.f32.mrb[0].mxu0
    %v131 = vadd.f32 0.0, %v130
    %v132 = vpop.f32.mrb[0].mxu0
    %v133 = vpop.f32.mrb[0].mxu0
    %v134 = vadd.f32 0.0, %v133
    %v135 = vpop.f32.mrb[0].mxu0
    %136 = vmatprep.mubr.bf16.mxu0 0
    %137 = vmatmul.mubr.bf16.gmra.mrb[0].mxu0 %v74
    %v138 = vpop.f32.mrb[0].mxu0
    %v139 = vadd.f32 0.0, %v138
    %v140 = vpop.f32.mrb[0].mxu0
    %v141 = vpop.f32.mrb[0].mxu0
    %v142 = vadd.f32 0.0, %v141
    %v143 = vpop.f32.mrb[0].mxu0
    %144 = vdwg.mxu0
    %v145 = vtanh.pop %v115
    %v146 = vtanh.pop %v118
    %v147 = vtanh.pop %v123
    %v148 = vtanh.pop %v126
    %v149 = vtanh.pop %v131
    %v150 = vtanh.pop %v134
    %v151 = vtanh.pop %v139
    %v152 = vtanh.pop %v142
    %v153 = vld [vmem:[#allocation2 + $0x20] sm:$0xf]
    %v154 = vld [vmem:[#allocation2 + $0x24] sm:$0xf]
    %v155 = vld [vmem:[%s2] sm:$0xff]
    %v156 = vld [vmem:[%s2 + $0x8] sm:$0xff]
    %v157 = vpack.c.bf16 %v146, %v145
    %v158 = vpack.c.bf16 %v148, %v147
    %v159 = vpack.c.bf16 %v150, %v149
    %v160 = vpack.c.bf16 %v152, %v151
    %162 = vset.pattern.permute.xlu0 0
    %163 = vperm.xlu0 %162, %v155
    %v164 = vpop.permute.xlu0 %163
    %167 = vset.pattern.permute.xlu0 0
    %168 = vperm.xlu0 %167, %v156
    %v169 = vpop.permute.xlu0 %168
    %v173 = vunpack.c.l.b16 %v153
    %v174 = vunpack.c.l.b16 %v154
    %v175 = vpack.c.b16 %v174, %v173
    %vm176 = vcmask 523264
    %v178 = vsel %vm176, %v175, 0
    %180 = vmatprep.subr.bf16.mxu0 0
    %181 = vmatpush1.bf16.msra.mxu0 %v157
    %182 = vmatprep.subr.bf16.mxu0 0
    %183 = vmatpush1.bf16.msra.mxu0 %v158
    %184 = vmatprep.subr.bf16.mxu0 0
    %185 = vmatpush1.bf16.msra.mxu0 %v159
    %186 = vmatprep.subr.bf16.mxu0 0
    %187 = vmatpush1.bf16.msra.mxu0 %v160
    %188 = vmatprep.subr.bf16.mxu0 0
    %189 = vmatpush1.bf16.msra.mxu0 0
    %190 = vmatprep.subr.bf16.mxu0 0
    %191 = vmatpush1.bf16.msra.mxu0 0
    %192 = vmatprep.subr.bf16.mxu0 0
    %193 = vmatpush1.bf16.msra.mxu0 0
    %194 = vmatprep.subr.bf16.mxu0 0
    %195 = vmatpush1.bf16.msra.mxu0 0
    %196 = vmatprep.subr.bf16.mxu0 0
    %197 = vmatpush1.bf16.msra.mxu0 0
    %198 = vmatprep.subr.bf16.mxu0 0
    %199 = vmatpush1.bf16.msra.mxu0 0
    %200 = vmatprep.subr.bf16.mxu0 0
    %201 = vmatpush1.bf16.msra.mxu0 0
    %202 = vmatprep.subr.bf16.mxu0 0
    %203 = vmatpush1.bf16.msra.mxu0 0
    %204 = vmatprep.subr.bf16.mxu0 0
    %205 = vmatpush1.bf16.msra.mxu0 0
    %206 = vmatprep.subr.bf16.mxu0 0
    %207 = vmatpush1.bf16.msra.mxu0 0
    %208 = vmatprep.subr.bf16.mxu0 0
    %209 = vmatpush1.bf16.msra.mxu0 0
    %210 = vmatprep.subr.bf16.mxu0 0
    %211 = vmatpush1.bf16.msra.mxu0 0
    %212 = vmatprep.mubr.bf16.mxu0 0
    %213 = vmatmul.mubr.bf16.gmra.mrb[0].mxu0 %v178
    %v214 = vpop.f32.mrb[0].mxu0
    %v215 = vadd.f32 %v164, %v214
    %v216 = vpop.f32.mrb[0].mxu0
    %v217 = vpop.f32.mrb[0].mxu0
    %v218 = vadd.f32 %v169, %v217
    %v219 = vpop.f32.mrb[0].mxu0
    %220 = vdwg.mxu0
    %221 = vset.pattern.permute.xlu0 1
    %222 = vperm.xlu0 %221, %v155
    %v223 = vpop.permute.xlu0 %222
    %225 = vset.pattern.permute.xlu0 1
    %226 = vperm.xlu0 %225, %v156
    %v227 = vpop.permute.xlu0 %226
    %v229 = vlaneseq
    %v230 = vshrl.u32 %v229, 7
    %v231 = vsub.s32 0, %v230
    %v232 = vrot.slane %v32, %v231
    %v233 = vmul.f32 %v223, %v232
    %v234 = vmul.f32 %v227, %v232
    %v235 = vtanh.pop %v233
    %v236 = vtanh.pop %v234
    %v237 = vmul.f32 %v215, %v235
    %v238 = vmul.f32 %v218, %v236
    %239 = vset.pattern.permute.xlu0 2
    %240 = vperm.xlu0 %239, %v155
    %v241 = vpop.permute.xlu0 %240
    %v243 = vmul.f32 %v30, %v241
    %v244 = vsub.f32 1.0, %v155
    %v245 = vmul.f32 %v237, 1.442695
    %v246 = vpow.pop %v245
    %v247 = vmul.f32 %v30, %v246
    %v248 = vadd.f32 %v247, %v238
    %250 = vset.pattern.permute.xlu0 2
    %251 = vperm.xlu0 %250, %v244
    %v252 = vpop.permute.xlu0 %251
    %v254 = vmul.f32 %v252, %v248
    %v255 = vadd.f32 %v243, %v254
    %v256 = vpack.c.bf16 %v31, %v255
    %v257 = vld [vmem:[#allocation2 + $0x28] sm:$0xf]
    %v258 = vld [vmem:[#allocation2 + $0x2c] sm:$0xf]
    %v259 = vld [vmem:[#allocation2 + $0x30] sm:$0xf]
    %v260 = vld [vmem:[#allocation2 + $0x34] sm:$0xf]
    %v261 = vld [vmem:[#allocation2 + $0x38] sm:$0xf]
    %v262 = vld [vmem:[#allocation2 + $0x3c] sm:$0xf]
    %v263 = vld [vmem:[#allocation2 + $0x40] sm:$0xf]
    %v264 = vld [vmem:[#allocation2 + $0x44] sm:$0xf]
    %v273 = vunpack.c.l.b16 %v257
    %v274 = vunpack.c.l.b16 %v258
    %v275 = vunpack.c.l.b16 %v259
    %v276 = vunpack.c.l.b16 %v260
    %v277 = vunpack.c.l.b16 %v261
    %v278 = vunpack.c.l.b16 %v262
    %v279 = vunpack.c.l.b16 %v263
    %v280 = vunpack.c.l.b16 %v264
    %v281 = vpack.c.b16 %v274, %v273
    %v282 = vpack.c.b16 %v276, %v275
    %v283 = vpack.c.b16 %v278, %v277
    %v284 = vpack.c.b16 %v280, %v279
    %v286 = vsel %vm63, %v281, 0
    %v289 = vsel %vm63, %v282, 0
    %v292 = vsel %vm63, %v283, 0
    %v295 = vsel %vm63, %v284, 0
    %297 = vmatprep.subr.bf16.mxu0 0
    %298 = vmatpush1.bf16.msra.mxu0 %v256
    %299 = vmatprep.subr.bf16.mxu0 0
    %300 = vmatpush1.bf16.msra.mxu0 %v78
    %301 = vmatprep.subr.bf16.mxu0 0
    %302 = vmatpush1.bf16.msra.mxu0 0
    %303 = vmatprep.subr.bf16.mxu0 0
    %304 = vmatpush1.bf16.msra.mxu0 0
    %305 = vmatprep.subr.bf16.mxu0 0
    %306 = vmatpush1.bf16.msra.mxu0 0
    %307 = vmatprep.subr.bf16.mxu0 0
    %308 = vmatpush1.bf16.msra.mxu0 0
    %309 = vmatprep.subr.bf16.mxu0 0
    %310 = vmatpush1.bf16.msra.mxu0 0
    %311 = vmatprep.subr.bf16.mxu0 0
    %312 = vmatpush1.bf16.msra.mxu0 0
    %313 = vmatprep.subr.bf16.mxu0 0
    %314 = vmatpush1.bf16.msra.mxu0 0
    %315 = vmatprep.subr.bf16.mxu0 0
    %316 = vmatpush1.bf16.msra.mxu0 0
    %317 = vmatprep.subr.bf16.mxu0 0
    %318 = vmatpush1.bf16.msra.mxu0 0
    %319 = vmatprep.subr.bf16.mxu0 0
    %320 = vmatpush1.bf16.msra.mxu0 0
    %321 = vmatprep.subr.bf16.mxu0 0
    %322 = vmatpush1.bf16.msra.mxu0 0
    %323 = vmatprep.subr.bf16.mxu0 0
    %324 = vmatpush1.bf16.msra.mxu0 0
    %325 = vmatprep.subr.bf16.mxu0 0
    %326 = vmatpush1.bf16.msra.mxu0 0
    %327 = vmatprep.subr.bf16.mxu0 0
    %328 = vmatpush1.bf16.msra.mxu0 0
    %329 = vmatprep.mubr.bf16.mxu0 0
    %330 = vmatmul.mubr.bf16.gmra.mrb[0].mxu0 %v286
    %v331 = vpop.f32.mrb[0].mxu0
    %v332 = vadd.f32 0.0, %v331
    %v333 = vpop.f32.mrb[0].mxu0
    %v334 = vpop.f32.mrb[0].mxu0
    %v335 = vadd.f32 0.0, %v334
    %v336 = vpop.f32.mrb[0].mxu0
    %337 = vmatprep.mubr.bf16.mxu0 0
    %338 = vmatmul.mubr.bf16.gmra.mrb[0].mxu0 %v289
    %v339 = vpop.f32.mrb[0].mxu0
    %v340 = vadd.f32 0.0, %v339
    %v341 = vpop.f32.mrb[0].mxu0
    %v342 = vpop.f32.mrb[0].mxu0
    %v343 = vadd.f32 0.0, %v342
    %v344 = vpop.f32.mrb[0].mxu0
    %345 = vmatprep.mubr.bf16.mxu0 0
    %346 = vmatmul.mubr.bf16.gmra.mrb[0].mxu0 %v292
    %v347 = vpop.f32.mrb[0].mxu0
    %v348 = vadd.f32 0.0, %v347
    %v349 = vpop.f32.mrb[0].mxu0
    %v350 = vpop.f32.mrb[0].mxu0
    %v351 = vadd.f32 0.0, %v350
    %v352 = vpop.f32.mrb[0].mxu0
    %353 = vmatprep.mubr.bf16.mxu0 0
    %354 = vmatmul.mubr.bf16.gmra.mrb[0].mxu0 %v295
    %v355 = vpop.f32.mrb[0].mxu0
    %v356 = vadd.f32 0.0, %v355
    %v357 = vpop.f32.mrb[0].mxu0
    %v358 = vpop.f32.mrb[0].mxu0
    %v359 = vadd.f32 0.0, %v358
    %v360 = vpop.f32.mrb[0].mxu0
    %361 = vdwg.mxu0
    %v362 = vtanh.pop %v332
    %v363 = vtanh.pop %v335
    %v364 = vtanh.pop %v340
    %v365 = vtanh.pop %v343
    %v366 = vtanh.pop %v348
    %v367 = vtanh.pop %v351
    %v368 = vtanh.pop %v356
    %v369 = vtanh.pop %v359
    %v370 = vld [vmem:[#allocation2 + $0x48] sm:$0xf]
    %v371 = vld [vmem:[#allocation2 + $0x4c] sm:$0xf]
    %v372 = vld [vmem:[%s2 + $0x10] sm:$0xff]
    %v373 = vld [vmem:[%s2 + $0x18] sm:$0xff]
    %v374 = vpack.c.bf16 %v363, %v362
    %v375 = vpack.c.bf16 %v365, %v364
    %v376 = vpack.c.bf16 %v367, %v366
    %v377 = vpack.c.bf16 %v369, %v368
    %379 = vset.pattern.permute.xlu0 0
    %380 = vperm.xlu0 %379, %v372
    %v381 = vpop.permute.xlu0 %380
    %384 = vset.pattern.permute.xlu0 0
    %385 = vperm.xlu0 %384, %v373
    %v386 = vpop.permute.xlu0 %385
    %v390 = vunpack.c.l.b16 %v370
    %v391 = vunpack.c.l.b16 %v371
    %v392 = vpack.c.b16 %v391, %v390
    %v394 = vsel %vm176, %v392, 0
    %396 = vmatprep.subr.bf16.mxu0 0
    %397 = vmatpush1.bf16.msra.mxu0 %v374
    %398 = vmatprep.subr.bf16.mxu0 0
    %399 = vmatpush1.bf16.msra.mxu0 %v375
    %400 = vmatprep.subr.bf16.mxu0 0
    %401 = vmatpush1.bf16.msra.mxu0 %v376
    %402 = vmatprep.subr.bf16.mxu0 0
    %403 = vmatpush1.bf16.msra.mxu0 %v377
    %404 = vmatprep.subr.bf16.mxu0 0
    %405 = vmatpush1.bf16.msra.mxu0 0
    %406 = vmatprep.subr.bf16.mxu0 0
    %407 = vmatpush1.bf16.msra.mxu0 0
    %408 = vmatprep.subr.bf16.mxu0 0
    %409 = vmatpush1.bf16.msra.mxu0 0
    %410 = vmatprep.subr.bf16.mxu0 0
    %411 = vmatpush1.bf16.msra.mxu0 0
    %412 = vmatprep.subr.bf16.mxu0 0
    %413 = vmatpush1.bf16.msra.mxu0 0
    %414 = vmatprep.subr.bf16.mxu0 0
    %415 = vmatpush1.bf16.msra.mxu0 0
    %416 = vmatprep.subr.bf16.mxu0 0
    %417 = vmatpush1.bf16.msra.mxu0 0
    %418 = vmatprep.subr.bf16.mxu0 0
    %419 = vmatpush1.bf16.msra.mxu0 0
    %420 = vmatprep.subr.bf16.mxu0 0
    %421 = vmatpush1.bf16.msra.mxu0 0
    %422 = vmatprep.subr.bf16.mxu0 0
    %423 = vmatpush1.bf16.msra.mxu0 0
    %424 = vmatprep.subr.bf16.mxu0 0
    %425 = vmatpush1.bf16.msra.mxu0 0
    %426 = vmatprep.subr.bf16.mxu0 0
    %427 = vmatpush1.bf16.msra.mxu0 0
    %428 = vmatprep.mubr.bf16.mxu0 0
    %429 = vmatmul.mubr.bf16.gmra.mrb[0].mxu0 %v394
    %v430 = vpop.f32.mrb[0].mxu0
    %v431 = vadd.f32 %v381, %v430
    %v432 = vpop.f32.mrb[0].mxu0
    %v433 = vpop.f32.mrb[0].mxu0
    %v434 = vadd.f32 %v386, %v433
    %v435 = vpop.f32.mrb[0].mxu0
    %436 = vdwg.mxu0
    %437 = vset.pattern.permute.xlu0 1
    %438 = vperm.xlu0 %437, %v372
    %v439 = vpop.permute.xlu0 %438
    %441 = vset.pattern.permute.xlu0 1
    %442 = vperm.xlu0 %441, %v373
    %v443 = vpop.permute.xlu0 %442
    %v445 = vmul.f32 %v439, %v232
    %v446 = vmul.f32 %v443, %v232
    %v447 = vtanh.pop %v445
    %v448 = vtanh.pop %v446
    %v449 = vmul.f32 %v431, %v447
    %v450 = vmul.f32 %v434, %v448
    %451 = vset.pattern.permute.xlu0 2
    %452 = vperm.xlu0 %451, %v372
    %v453 = vpop.permute.xlu0 %452
    %v455 = vmul.f32 %v255, %v453
    %v456 = vsub.f32 1.0, %v372
    %v457 = vmul.f32 %v449, 1.442695
    %v458 = vpow.pop %v457
    %v459 = vmul.f32 %v255, %v458
    %v460 = vadd.f32 %v459, %v450
    %462 = vset.pattern.permute.xlu0 2
    %463 = vperm.xlu0 %462, %v456
    %v464 = vpop.permute.xlu0 %463
    %v466 = vmul.f32 %v464, %v460
    %v467 = vadd.f32 %v455, %v466
    %468 = vst [vmem:[#allocation5] sm:$0xff] %v467
    // Predicated region
    $region18: #{tpu_custom_call.1} parent=1 // pred_check
      _
    $region19: #{tpu_custom_call.1} parent=1 // pred_check_branch
      %470 = sbr.rel (0) target = $region21
    $region20: #{tpu_custom_call.1} parent=1 // pred_region
      %s472 = ssub.s32 128, 128
      %473 = vsyncadd [#allocation4], %s472
      %s475 = sshll.u32 [#allocation5], 4
      %s476 = int_to_ptr.vmem [resolvable:$true] %s475
      %478 = dma.vmem_to_hbm [thread:$0]  %s476, 128, %s3, [#allocation4]
    $region21: #{tpu_custom_call.1} parent=1 // pred_fallthru
      _
    // Predicated region
    $region22: #{tpu_custom_call.1} parent=1 // pred_check
      _
    $region23: #{tpu_custom_call.1} parent=1 // pred_check_branch
      %480 = sbr.rel (0) target = $region25
    $region24: #{tpu_custom_call.1} parent=1 // pred_region
      %481 = dma.done [#allocation4], 128
    $region25: #{tpu_custom_call.1} parent=1 // pred_fallthru
      _
    %482 = vsyncpa [#allocation3], 1
    %483 = vsyncpa [#allocation4], 1

</llo_original>
